<compile_context>
chip_gen: v6e
topology: v6e:2x2x1
jax: 0.10.0
libtpu: 0.0.40
codegen_flags: <defaults>
</compile_context>

<pallas_src>
import functools
import math

import numpy as np
import jax
import jax.numpy as jnp
from jax import lax
from jax.experimental import pallas as pl
from jax.experimental.pallas import tpu as pltpu


# ----------------------------- trace-time constants ----------------------------------
def _pe_table(d):
    """(2, D) f32 table: row 0 = per-lane frequency, row 1 = per-lane phase (0 / pi/2)."""
    j = np.arange(d)
    freq = np.exp(-(j - (j % 2)) * (math.log(10000.0) / d))   # div_term[j // 2]
    phase = (j % 2) * (np.pi / 2.0)                           # sin on even, cos on odd
    return jnp.asarray(np.stack([freq, phase]).astype(np.float32))


# --------------------------------- Pallas kernels ------------------------------------
def _pe_kernel_default(tab_ref, x_ref, o_ref, *, block_rows, inv_batch):
    # tab_ref: (2, D) f32 resident table (freq row, phase row)
    # x_ref/o_ref: (TM, D) rows of the flattened (S*B, D) tensor, native dtype
    freq = tab_ref[0:1, :]                                     # (1, D)
    phase = tab_ref[1:2, :]                                    # (1, D)
    row = (pl.program_id(0) * block_rows
           + lax.broadcasted_iota(jnp.int32, x_ref.shape, 0))  # flat row index
    # seq position = row // B via floor((row + 0.5) * (1/B)); exact for row < 2^21.
    pos = jnp.floor((row.astype(jnp.float32) + 0.5) * inv_batch)
    pe = jnp.sin(pos * freq + phase)                           # 1 transcendental / elem
    o_ref[...] = (x_ref[...].astype(jnp.float32) + pe).astype(o_ref.dtype)


def _pe_kernel_pos(tab_ref, pos_ref, x_ref, o_ref):
    # pos_ref: (TM, 1) f32 explicit per-row position (custom_position path)
    freq = tab_ref[0:1, :]
    phase = tab_ref[1:2, :]
    pe = jnp.sin(pos_ref[...] * freq + phase)                  # (TM,1)*(1,D) -> (TM,D)
    o_ref[...] = (x_ref[...].astype(jnp.float32) + pe).astype(o_ref.dtype)


# ------------------------------------ wrapper -----------------------------------------
def _pick_block_rows(num_rows, d, itemsize):
    # 512-1024 row tiles sit at ~85-86% of the HBM roofline; VMEM holds ~4 blocks
    # (double-buffered in + out) -> keep that under ~8 MiB (default scoped VMEM is
    # 16 MiB on v5e, 32 MiB on v6e/v7x; v7x physical VMEM is only 64 MiB).
    target = 1024 if d <= 512 else 512
    per_row = 4 * d * itemsize
    tm = min(target, max(8, (8 * 1024 * 1024) // per_row))
    # v7x has 2 TensorCores: give the "parallel" axis at least 2 (balanced) steps.
    tm = min(tm, max(8, pl.cdiv(pl.cdiv(num_rows, 2), 8) * 8))
    tm = min(tm, num_rows)
    if num_rows >= 8:
        tm = max(8, (tm // 8) * 8)
    return tm


@jax.jit
def positional_encoding(x, custom_position=None):
    """x: (seq_len, batch, embedding_dim) -> x + positional encoding (same dtype)."""
    S, B, D = x.shape
    R = S * B
    x2 = x.reshape(R, D)                       # row-major flatten (bitcast when B % 8 == 0)
    tab = _pe_table(D)
    tm = _pick_block_rows(R, D, x.dtype.itemsize)
    grid = (pl.cdiv(R, tm),)

    x_spec = pl.BlockSpec((tm, D), lambda i: (i, 0))
    tab_spec = pl.BlockSpec((2, D), lambda i: (0, 0))          # resident across the grid
    out_shape = jax.ShapeDtypeStruct((R, D), x.dtype)
    cparams = pltpu.CompilerParams(dimension_semantics=("parallel",))

    if custom_position is None and R < (1 << 21):
        # Hot path: no position stream at all; positions come from program_id + iota.
        kernel = functools.partial(_pe_kernel_default,
                                   block_rows=tm, inv_batch=1.0 / B)
        out = pl.pallas_call(
            kernel,
            out_shape=out_shape,
            grid=grid,
            in_specs=[tab_spec, x_spec],
            out_specs=x_spec,
            compiler_params=cparams,
        )(tab, x2)
    else:
        # custom_position path (or huge R fallback): explicit (R, 1) f32 positions.
        if custom_position is None:
            pos = jnp.broadcast_to(jnp.arange(S, dtype=jnp.float32)[:, None], (S, B))
        else:
            pos = custom_position.astype(jnp.float32)
        pos2 = pos.reshape(R, 1)
        out = pl.pallas_call(
            _pe_kernel_pos,
            out_shape=out_shape,
            grid=grid,
            in_specs=[tab_spec, pl.BlockSpec((tm, 1), lambda i: (i, 0)), x_spec],
            out_specs=x_spec,
            compiler_params=cparams,
        )(tab, pos2, x2)

    # TODO(synk): Dropout(p=0.1) applied here in training mode; identity in eval.
    return out.reshape(S, B, D)


# ------------------------------- pure-JAX reference -----------------------------------
def reference_forward(x, custom_position=None):
    S, B, D = x.shape
    x = x.astype(jnp.float32)
    div_term = jnp.exp(jnp.arange(0, D, 2, dtype=jnp.float32)
                       * (-math.log(10000.0) / D))
    if custom_position is None:
        position = jnp.arange(S, dtype=jnp.float32)[:, None]          # (S, 1)
        angles = position * div_term                                    # (S, D/2)
        pe = jnp.zeros((S, D), jnp.float32)
        pe = pe.at[:, 0::2].set(jnp.sin(angles))
        pe = pe.at[:, 1::2].set(jnp.cos(angles))
        return x + pe[:, None, :]
    cp = custom_position.astype(jnp.float32)[:, :, None]               # (S, B, 1)
    angles = cp * div_term                                              # (S, B, D/2)
    pe = jnp.zeros((S, B, D), jnp.float32)
    pe = pe.at[:, :, 0::2].set(jnp.sin(angles))
    pe = pe.at[:, :, 1::2].set(jnp.cos(angles))
    return x + pe


# -------------------------------------- main -------------------------------------------
if __name__ == "__main__":
    key = jax.random.PRNGKey(0)
    kx, kp, kb = jax.random.split(key, 3)

    S, B, D = 16, 4, 128                      # (seq_len, batch, embedding_dim)
    x = jax.random.normal(kx, (S, B, D), jnp.float32)

    # Default path: x + pe[:S]
    out = jax.block_until_ready(positional_encoding(x))
    assert out.shape == (S, B, D) and out.dtype == jnp.float32
    np.testing.assert_allclose(np.asarray(out), np.asarray(reference_forward(x)),
                               rtol=1e-4, atol=1e-4)

    # custom_position path (per-token positions)
    custom_pos = jax.random.uniform(kp, (S, B), jnp.float32, 0.0, 64.0)
    out_c = jax.block_until_ready(positional_encoding(x, custom_position=custom_pos))
    assert out_c.shape == (S, B, D) and out_c.dtype == jnp.float32
    np.testing.assert_allclose(np.asarray(out_c),
                               np.asarray(reference_forward(x, custom_pos)),
                               rtol=1e-4, atol=1e-4)

    # bf16 input: dtype is preserved, math done in f32 inside the kernel
    xb = jax.random.normal(kb, (S, B, D), jnp.bfloat16)
    out_b = jax.block_until_ready(positional_encoding(xb))
    assert out_b.shape == (S, B, D) and out_b.dtype == jnp.bfloat16
    np.testing.assert_allclose(np.asarray(out_b, dtype=np.float32),
                               np.asarray(reference_forward(xb)),
                               rtol=2e-2, atol=5e-2)

    print("KERNEL_OK")
</pallas_src>

<mosaic_0001>
module attributes {stable_mosaic.version = 11 : i64} {
  func.func @_pe_kernel_default(%arg0: i32, %arg1: memref<2x128xf32, #tpu.memory_space<vmem>>, %arg2: memref<32x128xf32, #tpu.memory_space<vmem>>, %arg3: memref<32x128xf32, #tpu.memory_space<vmem>>) attributes {dimension_semantics = [#tpu.dimension_semantics<parallel>], iteration_bounds = array<i64: 2>, scalar_prefetch = 0 : i64, scratch_operands = 0 : i64, tpu.core_type = #tpu.core_type<tc>, window_params = [{pipeline_mode = #tpu.pipeline_mode<synchronous>, transform_indices = @transform_0, window_bounds = array<i64: 2, 128>}, {transform_indices = @transform_1, window_bounds = array<i64: 32, 128>}, {transform_indices = @transform_2, window_bounds = array<i64: 32, 128>}]} {
    %c0 = arith.constant 0 : index
    %c0_0 = arith.constant 0 : index
    %0 = vector.load %arg1[%c0, %c0_0] : memref<2x128xf32, #tpu.memory_space<vmem>>, vector<1x128xf32>
    %c1 = arith.constant 1 : index
    %c0_1 = arith.constant 0 : index
    %1 = vector.load %arg1[%c1, %c0_1] : memref<2x128xf32, #tpu.memory_space<vmem>>, vector<1x128xf32>
    %c32_i32 = arith.constant 32 : i32
    %2 = arith.muli %arg0, %c32_i32 : i32
    %3 = tpu.iota {dimensions = array<i32: 0>} : vector<32x128xi32>
    %4 = vector.broadcast %2 : i32 to vector<32x128xi32>
    %5 = arith.addi %4, %3 : vector<32x128xi32>
    %6 = arith.sitofp %5 : vector<32x128xi32> to vector<32x128xf32>
    %cst = arith.constant 5.000000e-01 : f32
    %7 = vector.broadcast %cst : f32 to vector<32x128xf32>
    %8 = arith.addf %6, %7 : vector<32x128xf32>
    %cst_2 = arith.constant 2.500000e-01 : f32
    %9 = vector.broadcast %cst_2 : f32 to vector<32x128xf32>
    %10 = arith.mulf %8, %9 : vector<32x128xf32>
    %11 = math.floor %10 : vector<32x128xf32>
    %12 = vector.broadcast %0 : vector<1x128xf32> to vector<32x128xf32>
    %13 = arith.mulf %11, %12 : vector<32x128xf32>
    %14 = vector.broadcast %1 : vector<1x128xf32> to vector<32x128xf32>
    %15 = arith.addf %13, %14 : vector<32x128xf32>
    %16 = math.sin %15 : vector<32x128xf32>
    %c0_3 = arith.constant 0 : index
    %c0_4 = arith.constant 0 : index
    %17 = vector.load %arg2[%c0_3, %c0_4] : memref<32x128xf32, #tpu.memory_space<vmem>>, vector<32x128xf32>
    %18 = arith.addf %17, %16 : vector<32x128xf32>
    %c0_5 = arith.constant 0 : index
    %c0_6 = arith.constant 0 : index
    %19 = vector.load %arg3[%c0_5, %c0_6] : memref<32x128xf32, #tpu.memory_space<vmem>>, vector<32x128xf32>
    tpu.vector_store %arg3[%c0_5, %c0_6], %18 {strides = array<i32>} : memref<32x128xf32, #tpu.memory_space<vmem>>, vector<32x128xf32>,
    return
  }
  func.func @transform_0(%arg0: i32) -> (i32, i32) {
    %c0_i32 = arith.constant 0 : i32
    %c0_i32_0 = arith.constant 0 : i32
    %c0_i32_1 = arith.constant 0 : i32
    return %c0_i32, %c0_i32_0 : i32, i32
  }
  func.func @transform_1(%arg0: i32) -> (i32, i32) {
    %c0_i32 = arith.constant 0 : i32
    %c0_i32_0 = arith.constant 0 : i32
    return %arg0, %c0_i32 : i32, i32
  }
  func.func @transform_2(%arg0: i32) -> (i32, i32) {
    %c0_i32 = arith.constant 0 : i32
    %c0_i32_0 = arith.constant 0 : i32
    return %arg0, %c0_i32 : i32, i32
  }
}

</mosaic_0001>

<llo_original>
// kernel: positional_encoding.1
$region0: #{positional_encoding.1}
  #allocation0 [shape = 'u32[]', space=smem, size = 0x4, offset = 0x4, fixed_abs, tag = 'smem constant byte address 0x4 - core index']
  #allocation1 [shape = 'u32[144,128]{1,0:T(1,128)}', space=vmem, size = 0x12000, scoped, tag = 'internal scratch']
  %s0 = inlined_call_operand.vmem [shape: f32[2,128], index: 0, kind: input, shape index: {}]
  %s1 = inlined_call_operand.hbm [shape: f32[64,128], index: 1, kind: input, shape index: {}]
  %s2 = inlined_call_operand.hbm [shape: f32[64,128], index: 2, kind: output, shape index: {}]
  %s3 = sld [smem:[#allocation0]]
  $region45: #{positional_encoding.1} parent=0
    _
  %s5 = ssub.s32 1, %s3
  %s6 = scalar_select 0, %s5, %s3
  $region1: #{positional_encoding.1} parent=0
    #allocation2 [shape = 'u8[32768]{0}', space=vmem, size = 0x8000, scoped, tag = 'input window, operand 1']
    #allocation3 [shape = 's32[2]{0}', space=sflag, size = 0x8, scoped, tag = 'scoped memory for positional_encoding.1']
    #allocation4 [shape = 's32[2]{0}', space=sflag, size = 0x8, scoped, tag = 'scoped memory for positional_encoding.1']
    #allocation5 [shape = 'u8[32768]{0}', space=vmem, size = 0x8000, scoped, tag = 'output window, operand 0']
    %7 = vsyncpa [#allocation3], 0
    %s8 = scalar_lea.sflag [#allocation3], 1
    %9 = vsyncpa %s8, 0
    %10 = vsyncpa [#allocation4], 0
    %s11 = scalar_lea.sflag [#allocation4], 1
    %12 = vsyncpa %s11, 0
    loop: start=0, step=1, limit=4
    $region2: #{positional_encoding.1} parent=1 // loop_pre_header
      _
    $region3: #{positional_encoding.1} parent=1 // loop_header
      %s14 = sphi 0, %s18
      %p15 = scmp.ge.s32.totalorder %s14, 4
      %s22 = sphi 0, %s22
      %s24 = sphi 0, %s22
      %s25 = sphi 0, %s24
      %s39 = sphi 0, %s25
      %s45 = sphi 0, %s47
      %s48 = sphi 0, %s45
      %s49 = sphi 0, %s48
      %s65 = sphi 0, %s49
      %s71 = sphi 0, %s73
      %s74 = sphi 0, %s71
      %s75 = sphi 0, %s74
      %s91 = sphi 0, %s75
    $region4: #{positional_encoding.1} parent=1 // loop_header_branch
      %17 = sbr.rel (%p15) target = $region8
    $region5: #{positional_encoding.1} parent=1 // loop_body
      %s19 = ssub.s32 %s14, 1
      %s20 = ssub.s32 %s14, 2
      %s21 = sadd.s32 %s14, 1
      %s23 = sadd.s32 %s22, 1
      %p26 = scmp.eq.s32.totalorder %s14, 1
      %p27 = scmp.ne.s32.totalorder %s22, %s24
      %p28 = scmp.eq.s32.totalorder %s14, 0
      %p29 = por %p27, %p28
      %p30 = scmp.ne.s32.totalorder %s22, %s24
      %p31 = scmp.eq.s32.totalorder %s19, 1
      %p32 = por %p30, %p31
      %p33 = scmp.ne.s32.totalorder %s24, %s25
      %p34 = scmp.eq.s32.totalorder %s19, 0
      %p35 = por %p33, %p34
      %p36 = scmp.ne.s32.totalorder %s24, %s25
      %p37 = scmp.eq.s32.totalorder %s20, 1
      %p38 = por %p36, %p37
      %p40 = scmp.ne.s32.totalorder %s25, %s39
      %p41 = scmp.eq.s32.totalorder %s20, 0
      %p42 = por %p40, %p41
      %s43 = ssub.s32 %s14, %s21
      %p44 = scmp.eq.s32.totalorder %s43, 0
      %s46 = sadd.s32 %s45, 1
      %s47 = scalar_select %p44, %s45, %s46
      %p50 = pneg %p44
      %p51 = scmp.eq.s32.totalorder %s14, 1
      %p52 = por %p50, %p51
      %p53 = scmp.ne.s32.totalorder %s45, %s48
      %p54 = scmp.eq.s32.totalorder %s14, 0
      %p55 = por %p53, %p54
      %p56 = scmp.ne.s32.totalorder %s45, %s48
      %p57 = scmp.eq.s32.totalorder %s19, 1
      %p58 = por %p56, %p57
      %p59 = scmp.ne.s32.totalorder %s48, %s49
      %p60 = scmp.eq.s32.totalorder %s19, 0
      %p61 = por %p59, %p60
      %p62 = scmp.ne.s32.totalorder %s48, %s49
      %p63 = scmp.eq.s32.totalorder %s20, 1
      %p64 = por %p62, %p63
      %p66 = scmp.ne.s32.totalorder %s49, %s65
      %p67 = scmp.eq.s32.totalorder %s20, 0
      %p68 = por %p66, %p67
      %s69 = ssub.s32 %s14, %s21
      %p70 = scmp.eq.s32.totalorder %s69, 0
      %s72 = sadd.s32 %s71, 1
      %s73 = scalar_select %p70, %s71, %s72
      %p76 = pneg %p70
      %p77 = scmp.eq.s32.totalorder %s14, 1
      %p78 = por %p76, %p77
      %p79 = scmp.ne.s32.totalorder %s71, %s74
      %p80 = scmp.eq.s32.totalorder %s14, 0
      %p81 = por %p79, %p80
      %p82 = scmp.ne.s32.totalorder %s71, %s74
      %p83 = scmp.eq.s32.totalorder %s19, 1
      %p84 = por %p82, %p83
      %p85 = scmp.ne.s32.totalorder %s74, %s75
      %p86 = scmp.eq.s32.totalorder %s19, 0
      %p87 = por %p85, %p86
      %p88 = scmp.ne.s32.totalorder %s74, %s75
      %p89 = scmp.eq.s32.totalorder %s20, 1
      %p90 = por %p88, %p89
      %p92 = scmp.ne.s32.totalorder %s75, %s91
      %p93 = scmp.eq.s32.totalorder %s20, 0
      %p94 = por %p92, %p93
      %p95 = scmp.le.s32.totalorder 1, %s14
      %p96 = scmp.lt.s32.totalorder %s14, 3
      %p97 = pnand %p95, %p96
      %p98 = pneg %p97
      // Predicated region
      $region9: #{positional_encoding.1} parent=5 // pred_check
        _
      $region10: #{positional_encoding.1} parent=5 // pred_check_branch
        %100 = sbr.rel (%p97) target = $region12
      $region11: #{positional_encoding.1} parent=5 // pred_region
        %s101 = ssub.s32 %s14, 1
        // Predicated region
        $region13: #{positional_encoding.1} parent=11 // pred_check
          %p102 = pneg %p35
        $region14: #{positional_encoding.1} parent=11 // pred_check_branch
          %104 = sbr.rel (%p102) target = $region16
        $region15: #{positional_encoding.1} parent=11 // pred_region
          _
        $region16: #{positional_encoding.1} parent=11 // pred_fallthru
          _
      $region12: #{positional_encoding.1} parent=5 // pred_fallthru
        _
      %p105 = scmp.lt.s32.totalorder %s14, 2
      // Predicated region
      $region17: #{positional_encoding.1} parent=5 // pred_check
        %p106 = pneg %p105
      $region18: #{positional_encoding.1} parent=5 // pred_check_branch
        %108 = sbr.rel (%p106) target = $region20
      $region19: #{positional_encoding.1} parent=5 // pred_region
        // Predicated region
        $region21: #{positional_encoding.1} parent=19 // pred_check
          %p109 = pneg %p55
        $region22: #{positional_encoding.1} parent=19 // pred_check_branch
          %111 = sbr.rel (%p109) target = $region24
        $region23: #{positional_encoding.1} parent=19 // pred_region
          %s112 = sand.u32 %s45, 1
          %s113 = scalar_lea.sflag [#allocation3], %s112
          %s114 = sand.u32 %s45, 1
          %s115 = smul.addr %s114, 32
          %s116 = scalar_lea.vmem [#allocation2], %s115
          %s117 = smul.u32 4, %s14
          %s119 = ssub.s32 512, 512
          %120 = vsyncadd %s113, %s119
          %s121 = smul.addr %s117, 128
          %s122 = scalar_lea.hbm %s1, %s121
          %s123 = sshll.u32 %s116, 4
          %s124 = int_to_ptr.vmem [resolvable:$true] %s123
          %129 = dma.hbm_to_vmem [thread:$0]  %s122, 512, %s124, %s113, 128, 128, 8
        $region24: #{positional_encoding.1} parent=19 // pred_fallthru
          _
      $region20: #{positional_encoding.1} parent=5 // pred_fallthru
        _
      %p130 = scmp.le.s32.totalorder 1, %s14
      %p131 = scmp.lt.s32.totalorder %s14, 3
      %p132 = pnand %p130, %p131
      %p133 = pneg %p132
      // Predicated region
      $region25: #{positional_encoding.1} parent=5 // pred_check
        _
      $region26: #{positional_encoding.1} parent=5 // pred_check_branch
        %135 = sbr.rel (%p132) target = $region28
      $region27: #{positional_encoding.1} parent=5 // pred_region
        %s136 = ssub.s32 %s14, 1
        %s137 = sand.u32 %s48, 1
        %s138 = scalar_lea.sflag [#allocation3], %s137
        %s139 = sand.u32 %s48, 1
        %s140 = smul.addr %s139, 32
        %s141 = scalar_lea.vmem [#allocation2], %s140
        // Predicated region
        $region29: #{positional_encoding.1} parent=27 // pred_check
          %p142 = pneg %p61
        $region30: #{positional_encoding.1} parent=27 // pred_check_branch
          %144 = sbr.rel (%p142) target = $region32
        $region31: #{positional_encoding.1} parent=27 // pred_region
          %145 = dma.done %s138, 512
        $region32: #{positional_encoding.1} parent=27 // pred_fallthru
          _
        %p146 = pneg %p35
        %p147 = pneg %p32
        %s148 = sand.u32 %s48, 1
        %s149 = scalar_lea.sflag [#allocation3], %s148
        %s150 = sand.u32 %s48, 1
        %s151 = smul.addr %s150, 32
        %s152 = scalar_lea.vmem [#allocation2], %s151
        %p153 = pneg %p61
        %p154 = pneg %p58
        %p155 = pneg %p87
        %p156 = pneg %p84
        %s157 = sand.u32 %s74, 1
        %s158 = scalar_lea.sflag [#allocation4], %s157
        %s159 = sand.u32 %s74, 1
        %s160 = smul.addr %s159, 32
        %s161 = scalar_lea.vmem [#allocation5], %s160
        %s162 = smul.u32 4, %s19
        %s163 = smul.u32 4, %s19
        %v164 = vld [vmem:[%s0] sm:$0x1]
        %v165 = vld [vmem:[%s0 + $0x1] sm:$0x1]
        %s166 = smul.u32 %s19, 32
        %v167 = vlaneseq
        %v168 = vshrl.u32 %v167, 7
        %v169 = vadd.s32 %v168, 8
        %v170 = vadd.s32 %v168, 16
        %v171 = vadd.s32 %v168, 24
        %v172 = vstv %s166
        %v173 = vadd.s32 %v172, %v168
        %v174 = vadd.s32 %v172, %v169
        %v175 = vadd.s32 %v172, %v170
        %v176 = vadd.s32 %v172, %v171
        %v177 = vcvt.s32.f32 %v173
        %v178 = vcvt.s32.f32 %v174
        %v179 = vcvt.s32.f32 %v175
        %v180 = vcvt.s32.f32 %v176
        %v181 = vadd.f32 %v177, 0.5
        %v182 = vadd.f32 %v178, 0.5
        %v183 = vadd.f32 %v179, 0.5
        %v184 = vadd.f32 %v180, 0.5
        %v185 = vmul.f32 %v181, 0.25
        %v186 = vmul.f32 %v182, 0.25
        %v187 = vmul.f32 %v183, 0.25
        %v188 = vmul.f32 %v184, 0.25
        %v189 = vfloor.f32 %v185
        %v190 = vfloor.f32 %v186
        %v191 = vfloor.f32 %v187
        %v192 = vfloor.f32 %v188
        %v193 = vlaneseq
        %v194 = vshrl.u32 %v193, 7
        %v195 = vsub.s32 0, %v194
        %v196 = vrot.slane %v164, %v195
        %v197 = vmul.f32 %v189, %v196
        %v198 = vmul.f32 %v190, %v196
        %v199 = vmul.f32 %v191, %v196
        %v200 = vmul.f32 %v192, %v196
        %v201 = vlaneseq
        %v202 = vshrl.u32 %v201, 7
        %v203 = vsub.s32 0, %v202
        %v204 = vrot.slane %v165, %v203
        %v205 = vadd.f32 %v197, %v204
        %v206 = vadd.f32 %v198, %v204
        %v207 = vadd.f32 %v199, %v204
        %v208 = vadd.f32 %v200, %v204
        %v209 = vand.u32 2147483647, %v205
        %vm210 = vcmp.le.f32.partialorder %v209, 0.7853982
        %vm211 = vcmp.lt.s32.totalorder %v205, 0
        %v212 = vand.u32 %v205, 2139095040
        %v213 = vshrl.u32 %v212, 23
        %v214 = vsub.s32 %v213, 127
        %v215 = vand.u32 2147483647, %v205
        %v216 = vand.u32 %v215, 8388607
        %v217 = vor.u32 %v216, 8388608
        %v218 = vsub.s32 0, %v217
        %v219 = vadd.s32 %v214, 1
        %vm220 = vcmp.gt.s32.totalorder %v219, 0
        %v221 = vsel %vm220, %v219, 0
        %v222 = vshrl.u32 %v221, 5
        %v223 = vand.u32 %v221, 31
        %v224 = vsub.s32 32, %v223
        %v225 = vshrl.u32 683565275, %v224
        %v226 = vshll.u32 683565275, %v223
        %v227 = vshrl.u32 2475754826, %v224
        %v228 = vor.u32 %v226, %v227
        %v229 = vshll.u32 2475754826, %v223
        %v230 = vshrl.u32 2131351028, %v224
        %v231 = vor.u32 %v229, %v230
        %v232 = vshll.u32 2131351028, %v223
        %v233 = vshrl.u32 2102212464, %v224
        %v234 = vor.u32 %v232, %v233
        %v235 = vshll.u32 2102212464, %v223
        %v236 = vshrl.u32 920167782, %v224
        %v237 = vor.u32 %v235, %v236
        %v238 = vshll.u32 920167782, %v223
        %v239 = vshrl.u32 1326507024, %v224
        %v240 = vor.u32 %v238, %v239
        %vm241 = vcmp.lt.s32.totalorder %v222, 1
        %vm242 = vcmp.lt.s32.totalorder %v222, 2
        %vm243 = vcmp.lt.s32.totalorder %v222, 3
        %vm244 = vcmp.lt.s32.totalorder %v222, 4
        %v245 = vsel %vm241, %v225, %v228
        %v246 = vsel %vm244, %v234, 2102212464
        %v247 = vsel %vm243, %v231, %v246
        %v248 = vsel %vm242, %v245, %v247
        %v249 = vsel %vm241, %v228, %v231
        %v250 = vsel %vm244, %v237, 920167782
        %v251 = vsel %vm243, %v234, %v250
        %v252 = vsel %vm242, %v249, %v251
        %v253 = vsel %vm241, %v231, %v234
        %v254 = vsel %vm244, %v240, 1326507024
        %v255 = vsel %vm243, %v237, %v254
        %v256 = vsel %vm242, %v253, %v255
        %v257 = vshll.u32 %v217, 8
        %v258 = vmul.u32.u64.compose %v257, %v256
        %v259 = vextract.low.u32 %v258
        %v260 = vextract.high.u32 %v258
        %v261 = vmul.u32.u64.compose %v257, %v252
        %v262 = vextract.low.u32 %v261
        %v263 = vextract.high.u32 %v261
        %v264 = vmul.u32 %v257, %v248
        %v265 = vadd.s32 %v260, %v262
        %vm266 = vc.u32 %v260, %v262
        %v267 = vadd.s32 %v263, 1
        %v268 = vsel %vm266, %v267, %v263
        %v269 = vadd.s32 %v264, %v268
        %v270 = vadd.s32 %v269, 536870912
        %v271 = vshrl.u32 %v270, 30
        %v272 = vshll.u32 %v271, 30
        %v273 = vsub.s32 %v269, %v272
        %vm274 = vcmp.lt.s32.totalorder %v273, 0
        %v275 = vsub.s32 0, %v273
        %v276 = vsel %vm274, %v275, %v273
        %v277 = vclz %v276
        %v278 = vsub.s32 %v277, 2
        %vm279 = vcmp.gt.s32.totalorder 0, %v278
        %v280 = vsel %vm279, 0, %v278
        %v281 = vsub.s32 32, %v280
        %v282 = vshll.u32 %v273, %v280
        %v283 = vshrl.u32 %v265, %v281
        %v284 = vor.u32 %v282, %v283
        %v285 = vsub.s32 4294967266, %v280
        %v286 = vadd.s32 %v285, 127
        %v287 = vshll.u32 %v286, 23
        %v288 = vor.u32 4788187, %v287
        %v289 = vand.u32 2147483647, %v288
        %v291 = vcvt.s32.f32 %v284
        %v292 = vmul.f32 %v291, %v289
        %v293 = vxor.u32 %v292, 2147483648
        %v294 = vsel %vm211, %v293, %v292
        %v295 = vsub.s32 4, %v271
        %v296 = vsel %vm211, %v295, %v271
        %v297 = vsel %vm210, %v205, %v294
        %v298 = vsel %vm210, 0, %v296
        %v299 = vcosq.f32.pop %v297
        %v300 = vsinq.f32.pop %v297
        %vm301 = vweird.f32 %v205
        %v302 = vadd.s32 %v298, 3
        %v303 = vand.u32 %v302, 3
        %vm304 = vcmp.lt.s32.totalorder %v303, 2
        %vm305 = vcmp.eq.s32.totalorder %v303, 0
        %v306 = vxor.u32 %v300, 2147483648
        %v307 = vsel %vm305, %v299, %v306
        %vm308 = vcmp.eq.s32.totalorder %v303, 2
        %v309 = vxor.u32 %v299, 2147483648
        %v310 = vsel %vm308, %v309, %v300
        %v311 = vsel %vm304, %v307, %v310
        %v312 = vsel %vm301, nan, %v311
        %v313 = vand.u32 2147483647, %v206
        %vm314 = vcmp.le.f32.partialorder %v313, 0.7853982
        %vm315 = vcmp.lt.s32.totalorder %v206, 0
        %v316 = vand.u32 %v206, 2139095040
        %v317 = vshrl.u32 %v316, 23
        %v318 = vsub.s32 %v317, 127
        %v319 = vand.u32 2147483647, %v206
        %v320 = vand.u32 %v319, 8388607
        %v321 = vor.u32 %v320, 8388608
        %v322 = vsub.s32 0, %v321
        %v323 = vadd.s32 %v318, 1
        %vm324 = vcmp.gt.s32.totalorder %v323, 0
        %v325 = vsel %vm324, %v323, 0
        %v326 = vshrl.u32 %v325, 5
        %v327 = vand.u32 %v325, 31
        %v328 = vsub.s32 32, %v327
        %v329 = vshrl.u32 683565275, %v328
        %v330 = vshll.u32 683565275, %v327
        %v331 = vshrl.u32 2475754826, %v328
        %v332 = vor.u32 %v330, %v331
        %v333 = vshll.u32 2475754826, %v327
        %v334 = vshrl.u32 2131351028, %v328
        %v335 = vor.u32 %v333, %v334
        %v336 = vshll.u32 2131351028, %v327
        %v337 = vshrl.u32 2102212464, %v328
        %v338 = vor.u32 %v336, %v337
        %v339 = vshll.u32 2102212464, %v327
        %v340 = vshrl.u32 920167782, %v328
        %v341 = vor.u32 %v339, %v340
        %v342 = vshll.u32 920167782, %v327
        %v343 = vshrl.u32 1326507024, %v328
        %v344 = vor.u32 %v342, %v343
        %vm345 = vcmp.lt.s32.totalorder %v326, 1
        %vm346 = vcmp.lt.s32.totalorder %v326, 2
        %vm347 = vcmp.lt.s32.totalorder %v326, 3
        %vm348 = vcmp.lt.s32.totalorder %v326, 4
        %v349 = vsel %vm345, %v329, %v332
        %v350 = vsel %vm348, %v338, 2102212464
        %v351 = vsel %vm347, %v335, %v350
        %v352 = vsel %vm346, %v349, %v351
        %v353 = vsel %vm345, %v332, %v335
        %v354 = vsel %vm348, %v341, 920167782
        %v355 = vsel %vm347, %v338, %v354
        %v356 = vsel %vm346, %v353, %v355
        %v357 = vsel %vm345, %v335, %v338
        %v358 = vsel %vm348, %v344, 1326507024
        %v359 = vsel %vm347, %v341, %v358
        %v360 = vsel %vm346, %v357, %v359
        %v361 = vshll.u32 %v321, 8
        %v362 = vmul.u32.u64.compose %v361, %v360
        %v363 = vextract.low.u32 %v362
        %v364 = vextract.high.u32 %v362
        %v365 = vmul.u32.u64.compose %v361, %v356
        %v366 = vextract.low.u32 %v365
        %v367 = vextract.high.u32 %v365
        %v368 = vmul.u32 %v361, %v352
        %v369 = vadd.s32 %v364, %v366
        %vm370 = vc.u32 %v364, %v366
        %v371 = vadd.s32 %v367, 1
        %v372 = vsel %vm370, %v371, %v367
        %v373 = vadd.s32 %v368, %v372
        %v374 = vadd.s32 %v373, 536870912
        %v375 = vshrl.u32 %v374, 30
        %v376 = vshll.u32 %v375, 30
        %v377 = vsub.s32 %v373, %v376
        %vm378 = vcmp.lt.s32.totalorder %v377, 0
        %v379 = vsub.s32 0, %v377
        %v380 = vsel %vm378, %v379, %v377
        %v381 = vclz %v380
        %v382 = vsub.s32 %v381, 2
        %vm383 = vcmp.gt.s32.totalorder 0, %v382
        %v384 = vsel %vm383, 0, %v382
        %v385 = vsub.s32 32, %v384
        %v386 = vshll.u32 %v377, %v384
        %v387 = vshrl.u32 %v369, %v385
        %v388 = vor.u32 %v386, %v387
        %v389 = vsub.s32 4294967266, %v384
        %v390 = vadd.s32 %v389, 127
        %v391 = vshll.u32 %v390, 23
        %v392 = vor.u32 4788187, %v391
        %v393 = vand.u32 2147483647, %v392
        %v395 = vcvt.s32.f32 %v388
        %v396 = vmul.f32 %v395, %v393
        %v397 = vxor.u32 %v396, 2147483648
        %v398 = vsel %vm315, %v397, %v396
        %v399 = vsub.s32 4, %v375
        %v400 = vsel %vm315, %v399, %v375
        %v401 = vsel %vm314, %v206, %v398
        %v402 = vsel %vm314, 0, %v400
        %v403 = vcosq.f32.pop %v401
        %v404 = vsinq.f32.pop %v401
        %vm405 = vweird.f32 %v206
        %v406 = vadd.s32 %v402, 3
        %v407 = vand.u32 %v406, 3
        %vm408 = vcmp.lt.s32.totalorder %v407, 2
        %vm409 = vcmp.eq.s32.totalorder %v407, 0
        %v410 = vxor.u32 %v404, 2147483648
        %v411 = vsel %vm409, %v403, %v410
        %vm412 = vcmp.eq.s32.totalorder %v407, 2
        %v413 = vxor.u32 %v403, 2147483648
        %v414 = vsel %vm412, %v413, %v404
        %v415 = vsel %vm408, %v411, %v414
        %v416 = vsel %vm405, nan, %v415
        %v417 = vand.u32 2147483647, %v207
        %vm418 = vcmp.le.f32.partialorder %v417, 0.7853982
        %vm419 = vcmp.lt.s32.totalorder %v207, 0
        %v420 = vand.u32 %v207, 2139095040
        %v421 = vshrl.u32 %v420, 23
        %v422 = vsub.s32 %v421, 127
        %v423 = vand.u32 2147483647, %v207
        %v424 = vand.u32 %v423, 8388607
        %v425 = vor.u32 %v424, 8388608
        %v426 = vsub.s32 0, %v425
        %v427 = vadd.s32 %v422, 1
        %vm428 = vcmp.gt.s32.totalorder %v427, 0
        %v429 = vsel %vm428, %v427, 0
        %v430 = vshrl.u32 %v429, 5
        %v431 = vand.u32 %v429, 31
        %v432 = vsub.s32 32, %v431
        %v433 = vshrl.u32 683565275, %v432
        %v434 = vshll.u32 683565275, %v431
        %v435 = vshrl.u32 2475754826, %v432
        %v436 = vor.u32 %v434, %v435
        %v437 = vshll.u32 2475754826, %v431
        %v438 = vshrl.u32 2131351028, %v432
        %v439 = vor.u32 %v437, %v438
        %v440 = vshll.u32 2131351028, %v431
        %v441 = vshrl.u32 2102212464, %v432
        %v442 = vor.u32 %v440, %v441
        %v443 = vshll.u32 2102212464, %v431
        %v444 = vshrl.u32 920167782, %v432
        %v445 = vor.u32 %v443, %v444
        %v446 = vshll.u32 920167782, %v431
        %v447 = vshrl.u32 1326507024, %v432
        %v448 = vor.u32 %v446, %v447
        %vm449 = vcmp.lt.s32.totalorder %v430, 1
        %vm450 = vcmp.lt.s32.totalorder %v430, 2
        %vm451 = vcmp.lt.s32.totalorder %v430, 3
        %vm452 = vcmp.lt.s32.totalorder %v430, 4
        %v453 = vsel %vm449, %v433, %v436
        %v454 = vsel %vm452, %v442, 2102212464
        %v455 = vsel %vm451, %v439, %v454
        %v456 = vsel %vm450, %v453, %v455
        %v457 = vsel %vm449, %v436, %v439
        %v458 = vsel %vm452, %v445, 920167782
        %v459 = vsel %vm451, %v442, %v458
        %v460 = vsel %vm450, %v457, %v459
        %v461 = vsel %vm449, %v439, %v442
        %v462 = vsel %vm452, %v448, 1326507024
        %v463 = vsel %vm451, %v445, %v462
        %v464 = vsel %vm450, %v461, %v463
        %v465 = vshll.u32 %v425, 8
        %v466 = vmul.u32.u64.compose %v465, %v464
        %v467 = vextract.low.u32 %v466
        %v468 = vextract.high.u32 %v466
        %v469 = vmul.u32.u64.compose %v465, %v460
        %v470 = vextract.low.u32 %v469
        %v471 = vextract.high.u32 %v469
        %v472 = vmul.u32 %v465, %v456
        %v473 = vadd.s32 %v468, %v470
        %vm474 = vc.u32 %v468, %v470
        %v475 = vadd.s32 %v471, 1
        %v476 = vsel %vm474, %v475, %v471
        %v477 = vadd.s32 %v472, %v476
        %v478 = vadd.s32 %v477, 536870912
        %v479 = vshrl.u32 %v478, 30
        %v480 = vshll.u32 %v479, 30
        %v481 = vsub.s32 %v477, %v480
        %vm482 = vcmp.lt.s32.totalorder %v481, 0
        %v483 = vsub.s32 0, %v481
        %v484 = vsel %vm482, %v483, %v481
        %v485 = vclz %v484
        %v486 = vsub.s32 %v485, 2
        %vm487 = vcmp.gt.s32.totalorder 0, %v486
        %v488 = vsel %vm487, 0, %v486
        %v489 = vsub.s32 32, %v488
        %v490 = vshll.u32 %v481, %v488
        %v491 = vshrl.u32 %v473, %v489
        %v492 = vor.u32 %v490, %v491
        %v493 = vsub.s32 4294967266, %v488
        %v494 = vadd.s32 %v493, 127
        %v495 = vshll.u32 %v494, 23
        %v496 = vor.u32 4788187, %v495
        %v497 = vand.u32 2147483647, %v496
        %v499 = vcvt.s32.f32 %v492
        %v500 = vmul.f32 %v499, %v497
        %v501 = vxor.u32 %v500, 2147483648
        %v502 = vsel %vm419, %v501, %v500
        %v503 = vsub.s32 4, %v479
        %v504 = vsel %vm419, %v503, %v479
        %v505 = vsel %vm418, %v207, %v502
        %v506 = vsel %vm418, 0, %v504
        %v507 = vcosq.f32.pop %v505
        %v508 = vsinq.f32.pop %v505
        %vm509 = vweird.f32 %v207
        %v510 = vadd.s32 %v506, 3
        %v511 = vand.u32 %v510, 3
        %vm512 = vcmp.lt.s32.totalorder %v511, 2
        %vm513 = vcmp.eq.s32.totalorder %v511, 0
        %v514 = vxor.u32 %v508, 2147483648
        %v515 = vsel %vm513, %v507, %v514
        %vm516 = vcmp.eq.s32.totalorder %v511, 2
        %v517 = vxor.u32 %v507, 2147483648
        %v518 = vsel %vm516, %v517, %v508
        %v519 = vsel %vm512, %v515, %v518
        %v520 = vsel %vm509, nan, %v519
        %v521 = vand.u32 2147483647, %v208
        %vm522 = vcmp.le.f32.partialorder %v521, 0.7853982
        %vm523 = vcmp.lt.s32.totalorder %v208, 0
        %v524 = vand.u32 %v208, 2139095040
        %v525 = vshrl.u32 %v524, 23
        %v526 = vsub.s32 %v525, 127
        %v527 = vand.u32 2147483647, %v208
        %v528 = vand.u32 %v527, 8388607
        %v529 = vor.u32 %v528, 8388608
        %v530 = vsub.s32 0, %v529
        %v531 = vadd.s32 %v526, 1
        %vm532 = vcmp.gt.s32.totalorder %v531, 0
        %v533 = vsel %vm532, %v531, 0
        %v534 = vshrl.u32 %v533, 5
        %v535 = vand.u32 %v533, 31
        %v536 = vsub.s32 32, %v535
        %v537 = vshrl.u32 683565275, %v536
        %v538 = vshll.u32 683565275, %v535
        %v539 = vshrl.u32 2475754826, %v536
        %v540 = vor.u32 %v538, %v539
        %v541 = vshll.u32 2475754826, %v535
        %v542 = vshrl.u32 2131351028, %v536
        %v543 = vor.u32 %v541, %v542
        %v544 = vshll.u32 2131351028, %v535
        %v545 = vshrl.u32 2102212464, %v536
        %v546 = vor.u32 %v544, %v545
        %v547 = vshll.u32 2102212464, %v535
        %v548 = vshrl.u32 920167782, %v536
        %v549 = vor.u32 %v547, %v548
        %v550 = vshll.u32 920167782, %v535
        %v551 = vshrl.u32 1326507024, %v536
        %v552 = vor.u32 %v550, %v551
        %vm553 = vcmp.lt.s32.totalorder %v534, 1
        %vm554 = vcmp.lt.s32.totalorder %v534, 2
        %vm555 = vcmp.lt.s32.totalorder %v534, 3
        %vm556 = vcmp.lt.s32.totalorder %v534, 4
        %v557 = vsel %vm553, %v537, %v540
        %v558 = vsel %vm556, %v546, 2102212464
        %v559 = vsel %vm555, %v543, %v558
        %v560 = vsel %vm554, %v557, %v559
        %v561 = vsel %vm553, %v540, %v543
        %v562 = vsel %vm556, %v549, 920167782
        %v563 = vsel %vm555, %v546, %v562
        %v564 = vsel %vm554, %v561, %v563
        %v565 = vsel %vm553, %v543, %v546
        %v566 = vsel %vm556, %v552, 1326507024
        %v567 = vsel %vm555, %v549, %v566
        %v568 = vsel %vm554, %v565, %v567
        %v569 = vshll.u32 %v529, 8
        %v570 = vmul.u32.u64.compose %v569, %v568
        %v571 = vextract.low.u32 %v570
        %v572 = vextract.high.u32 %v570
        %v573 = vmul.u32.u64.compose %v569, %v564
        %v574 = vextract.low.u32 %v573
        %v575 = vextract.high.u32 %v573
        %v576 = vmul.u32 %v569, %v560
        %v577 = vadd.s32 %v572, %v574
        %vm578 = vc.u32 %v572, %v574
        %v579 = vadd.s32 %v575, 1
        %v580 = vsel %vm578, %v579, %v575
        %v581 = vadd.s32 %v576, %v580
        %v582 = vadd.s32 %v581, 536870912
        %v583 = vshrl.u32 %v582, 30
        %v584 = vshll.u32 %v583, 30
        %v585 = vsub.s32 %v581, %v584
        %vm586 = vcmp.lt.s32.totalorder %v585, 0
        %v587 = vsub.s32 0, %v585
        %v588 = vsel %vm586, %v587, %v585
        %v589 = vclz %v588
        %v590 = vsub.s32 %v589, 2
        %vm591 = vcmp.gt.s32.totalorder 0, %v590
        %v592 = vsel %vm591, 0, %v590
        %v593 = vsub.s32 32, %v592
        %v594 = vshll.u32 %v585, %v592
        %v595 = vshrl.u32 %v577, %v593
        %v596 = vor.u32 %v594, %v595
        %v597 = vsub.s32 4294967266, %v592
        %v598 = vadd.s32 %v597, 127
        %v599 = vshll.u32 %v598, 23
        %v600 = vor.u32 4788187, %v599
        %v601 = vand.u32 2147483647, %v600
        %v603 = vcvt.s32.f32 %v596
        %v604 = vmul.f32 %v603, %v601
        %v605 = vxor.u32 %v604, 2147483648
        %v606 = vsel %vm523, %v605, %v604
        %v607 = vsub.s32 4, %v583
        %v608 = vsel %vm523, %v607, %v583
        %v609 = vsel %vm522, %v208, %v606
        %v610 = vsel %vm522, 0, %v608
        %v611 = vcosq.f32.pop %v609
        %v612 = vsinq.f32.pop %v609
        %vm613 = vweird.f32 %v208
        %v614 = vadd.s32 %v610, 3
        %v615 = vand.u32 %v614, 3
        %vm616 = vcmp.lt.s32.totalorder %v615, 2
        %vm617 = vcmp.eq.s32.totalorder %v615, 0
        %v618 = vxor.u32 %v612, 2147483648
        %v619 = vsel %vm617, %v611, %v618
        %vm620 = vcmp.eq.s32.totalorder %v615, 2
        %v621 = vxor.u32 %v611, 2147483648
        %v622 = vsel %vm620, %v621, %v612
        %v623 = vsel %vm616, %v619, %v622
        %v624 = vsel %vm613, nan, %v623
        %v625 = vld [vmem:[%s141] sm:$0xff]
        %v626 = vld [vmem:[%s141 + $0x8] sm:$0xff]
        %v627 = vld [vmem:[%s141 + $0x10] sm:$0xff]
        %v628 = vld [vmem:[%s141 + $0x18] sm:$0xff]
        %v629 = vadd.f32 %v625, %v312
        %v630 = vadd.f32 %v626, %v416
        %v631 = vadd.f32 %v627, %v520
        %v632 = vadd.f32 %v628, %v624
        %633 = vst [vmem:[%s161] sm:$0xff] %v629
        %634 = vst [vmem:[%s161 + $0x8] sm:$0xff] %v630
        %635 = vst [vmem:[%s161 + $0x10] sm:$0xff] %v631
        %636 = vst [vmem:[%s161 + $0x18] sm:$0xff] %v632
        %s637 = sand.u32 %s74, 1
        %s638 = scalar_lea.sflag [#allocation4], %s637
        %s639 = sand.u32 %s74, 1
        %s640 = smul.addr %s639, 32
        %s641 = scalar_lea.vmem [#allocation5], %s640
        // Predicated region
        $region33: #{positional_encoding.1} parent=27 // pred_check
          %p642 = pneg %p84
        $region34: #{positional_encoding.1} parent=27 // pred_check_branch
          %644 = sbr.rel (%p642) target = $region36
        $region35: #{positional_encoding.1} parent=27 // pred_region
          %s645 = smul.u32 4, %s19
          %s647 = ssub.s32 512, 512
          %648 = vsyncadd %s638, %s647
          %s649 = smul.addr %s645, 128
          %s650 = scalar_lea.hbm %s2, %s649
          %s651 = sshll.u32 %s641, 4
          %s652 = int_to_ptr.vmem [resolvable:$true] %s651
          %657 = dma.vmem_to_hbm [thread:$0]  %s652, 512, %s650, %s638, 128, 128, 8
        $region36: #{positional_encoding.1} parent=27 // pred_fallthru
          _
      $region28: #{positional_encoding.1} parent=5 // pred_fallthru
        _
      %p658 = scmp.le.s32.totalorder 2, %s14
      // Predicated region
      $region37: #{positional_encoding.1} parent=5 // pred_check
        %p659 = pneg %p658
      $region38: #{positional_encoding.1} parent=5 // pred_check_branch
        %661 = sbr.rel (%p659) target = $region40
      $region39: #{positional_encoding.1} parent=5 // pred_region
        %s662 = ssub.s32 %s14, 2
        // Predicated region
        $region41: #{positional_encoding.1} parent=39 // pred_check
          %p663 = pneg %p90
        $region42: #{positional_encoding.1} parent=39 // pred_check_branch
          %665 = sbr.rel (%p663) target = $region44
        $region43: #{positional_encoding.1} parent=39 // pred_region
          %s666 = sand.u32 %s75, 1
          %s667 = scalar_lea.sflag [#allocation4], %s666
          %s668 = sand.u32 %s75, 1
          %s669 = smul.addr %s668, 32
          %s670 = scalar_lea.vmem [#allocation5], %s669
          %671 = dma.done %s667, 512
        $region44: #{positional_encoding.1} parent=39 // pred_fallthru
          _
      $region40: #{positional_encoding.1} parent=5 // pred_fallthru
        _
    $region6: #{positional_encoding.1} parent=1 // loop_footer
      %s18 = sadd.s32 1, %s14
    $region7: #{positional_encoding.1} parent=1 // loop_footer_branch
      %13 = sbr.rel target = $region3
    $region8: #{positional_encoding.1} parent=1 // loop_exit
      _
    %672 = vsyncpa [#allocation3], 1
    %s673 = scalar_lea.sflag [#allocation3], 1
    %674 = vsyncpa %s673, 1
    %675 = vsyncpa [#allocation4], 1
    %s676 = scalar_lea.sflag [#allocation4], 1
    %677 = vsyncpa %s676, 1

</llo_original>
